<compile_context>
chip_gen: v6e
topology: v6e:2x2x1
jax: 0.10.0
libtpu: 0.0.40
codegen_flags: <defaults>
</compile_context>

<pallas_src>
import jax
import jax.numpy as jnp
from jax.experimental import pallas as pl
from jax.experimental.pallas import tpu as pltpu

# Below this many bytes a bare `return x` beats any kernel launch.
_FAST_PATH_MAX_BYTES = 64 * 1024


def _identity_dma_kernel(x_hbm_ref, o_hbm_ref, copy_sem):
    """Identity forward: one full-array HBM->HBM DMA (no VMEM staging)."""
    cp = pltpu.make_async_copy(x_hbm_ref, o_hbm_ref, copy_sem)
    cp.start()
    cp.wait()


def base_model_forward(
    x: jax.Array, *, min_kernel_bytes: int = _FAST_PATH_MAX_BYTES
) -> jax.Array:
    """Identity forward pass of the (abstract) BaseModel.

    Tiny / empty inputs take a zero-cost fast path (pure no-op); larger
    inputs go through a single-descriptor HBM->HBM Pallas DMA copy kernel.
    Works for any shape and dtype; returns x unchanged.
    """
    nbytes = x.size * jnp.dtype(x.dtype).itemsize
    if x.size == 0 or nbytes < min_kernel_bytes:
        # True no-op: zero HBM traffic, zero launch overhead.
        return x

    return pl.pallas_call(
        _identity_dma_kernel,
        out_shape=jax.ShapeDtypeStruct(x.shape, x.dtype),
        # Raw HBM refs on both sides: no auto-DMA, no VMEM round trip.
        in_specs=[pl.BlockSpec(memory_space=pl.ANY)],
        out_specs=pl.BlockSpec(memory_space=pl.ANY),
        scratch_shapes=[pltpu.SemaphoreType.DMA(())],
    )(x)


if __name__ == "__main__":
    key = jax.random.PRNGKey(0)
    k1, k2 = jax.random.split(key)

    # Spec-consistent tiny NCHW input (2, 4, 16, 16) = 8 KiB fp32.
    x_small = jax.random.normal(k1, (2, 4, 16, 16), dtype=jnp.float32)

    # 1) Default call: takes the zero-cost fast path (< 64 KiB).
    y_fast = jax.block_until_ready(base_model_forward(x_small))
    assert y_fast.shape == x_small.shape and y_fast.dtype == x_small.dtype
    assert bool(jnp.array_equal(y_fast, x_small)), "fast-path identity mismatch"

    # 2) Force the Pallas HBM->HBM DMA kernel on the same spec-shaped input.
    y_kernel = jax.block_until_ready(base_model_forward(x_small, min_kernel_bytes=0))
    assert y_kernel.shape == x_small.shape and y_kernel.dtype == x_small.dtype
    assert bool(jnp.array_equal(y_kernel, x_small)), "kernel identity mismatch"

    # 3) A larger (still small) input that exceeds the fast-path threshold and
    #    exercises the kernel path through the default entry point (128 KiB).
    x_big = jax.random.normal(k2, (8, 4, 32, 32), dtype=jnp.float32)
    y_big = jax.block_until_ready(base_model_forward(x_big))
    assert y_big.shape == x_big.shape and y_big.dtype == x_big.dtype
    assert bool(jnp.array_equal(y_big, x_big)), "kernel identity mismatch (large)"

    print("KERNEL_OK")
</pallas_src>

<mosaic_0001>
module attributes {stable_mosaic.version = 11 : i64} {
  func.func @_identity_dma_kernel(%arg0: memref<2x4x16x16xf32, #tpu.memory_space<any>>, %arg1: memref<2x4x16x16xf32, #tpu.memory_space<any>>, %arg2: memref<!tpu.dma_semaphore, #tpu.memory_space<semaphore_mem>>) attributes {dimension_semantics = [], scalar_prefetch = 0 : i64, scratch_operands = 1 : i64, tpu.core_type = #tpu.core_type<tc>} {
    tpu.enqueue_dma source(%arg0 : memref<2x4x16x16xf32, #tpu.memory_space<any>>) target(%arg1 : memref<2x4x16x16xf32, #tpu.memory_space<any>>) target_semaphore(%arg2 : memref<!tpu.dma_semaphore, #tpu.memory_space<semaphore_mem>>)
    tpu.wait_dma2 semaphore(%arg2 : memref<!tpu.dma_semaphore, #tpu.memory_space<semaphore_mem>>) src(%arg0 : memref<2x4x16x16xf32, #tpu.memory_space<any>>) dst(%arg1 : memref<2x4x16x16xf32, #tpu.memory_space<any>>)
    return
  }
}

</mosaic_0001>

<llo_original>
// kernel: tpu_custom_call.1
$region0: #{tpu_custom_call.1}
  #allocation0 [shape = 'u32[]', space=smem, size = 0x4, offset = 0x4, fixed_abs, tag = 'smem constant byte address 0x4 - core index']
  #allocation1 [shape = 'u32[144,128]{1,0:T(1,128)}', space=vmem, size = 0x12000, scoped, tag = 'internal scratch']
  #allocation2 [shape = 's32[1]{0}', space=sflag, size = 0x4, scoped, tag = 'scratch operand']
  #allocation3 [shape = 's32[]', space=sflag, size = 0x4, offset = 0, fixed_abs, tag = 'sflag constant byte address 0x0 - dummy sync flag']
  #allocation4 [shape = 'u32[0]{0}', space=smem, size = 0, offset = 0, fixed_abs, tag = 'smem constant byte address 0x0 - null']
  %s0 = inlined_call_operand.hbm [shape: f32[2,4,16,16], index: 0, kind: input, shape index: {}]
  %s1 = inlined_call_operand.hbm [shape: f32[2,4,16,16], index: 1, kind: output, shape index: {}]
  %s2 = sld [smem:[#allocation0]]
  $region2: #{tpu_custom_call.1} parent=0
    _
  %s4 = ssub.s32 1, %s2
  %s5 = scalar_select 0, %s4, %s2
  %s7 = sshll.u32 1, 14
  %s8 = sxor.u32 4294967295, %s7
  %12 = dma.general %s0, 2048, %s1, [#allocation2], 131072, [#allocation4], 0, 0
  %s13 = smul.u32 2, 4
  %s14 = smul.u32 %s13, 16
  %s15 = smul.u32 %s14, 1
  %s16 = sshll.u32 %s15, 4
  %17 = dma.done [#allocation2], %s16
  %18 = vsyncmov [#allocation2]
  %s19 = vpop.sfrf %18
  %p20 = scmp.eq.s32.totalorder %s19, 0
  %p21 = pneg %p20
  %23 = shalt.err (%p21)

</llo_original>
